<compile_context>
chip_gen: v5e
topology: v5e:2x2
jax: 0.10.0
libtpu: 0.0.40
codegen_flags: <defaults>
</compile_context>

<pallas_src>
import jax
import jax.numpy as jnp
from jax.experimental import pallas as pl
from jax.experimental.pallas import tpu as pltpu

OUTPUT_SIZE = 128            # input_size of LinearRegression (disable_embedding=False)
EMB_DIM = OUTPUT_SIZE // 4   # 32: per-branch embedding width
D2 = 2 * EMB_DIM             # 64: fused branch width
OUT_CHANNELS = 2
OUT_PAD = 128                # lane-dense padded output width
TAB_ROWS = 128               # 101 real table rows padded to 128 (multi-hot K dim)

# vocab sizes / offsets into the fused table (disjoint ranges -> OR-able one-hots)
_P_VOCABS = (2, 2, 2, 11, 34)          # gender, korean, primary, job, rep -> cols 0..31
_C_VOCABS = (19, 31)                   # place, add                        -> cols 32..63
_P_OFFSETS = (0, 2, 4, 6, 17)
_C_OFFSETS = (51, 70)                  # 2+2+2+11+34 = 51; 51+19 = 70; total 101


def _round_up(x, m):
  return ((x + m - 1) // m) * m


def _linreg_kernel(cont_p_ref, cont_c_ref, cat_p_ref, cat_c_ref, vlen_ref,
                   w1p_ref, w1c_ref, b1_ref, w2_ref, b2_ref,
                   tab_ref, wl_ref, bl_ref, out_ref):
  f32 = jnp.float32
  TB, S, _ = cont_p_ref.shape

  # ---- vectorized valid-length mask weights over the TB rows of this block ----
  vlen = vlen_ref[...]                                        # (TB,1) i32
  inv_len = 1.0 / jnp.maximum(vlen.astype(f32), 1.0)          # guard len==0
  seq = jax.lax.broadcasted_iota(jnp.int32, (TB, S), 1)
  mask_w = jnp.where(seq < vlen, inv_len, 0.0)                # (TB,S) = mask/len
  bias_scale = jnp.sum(mask_w, axis=1, keepdims=True)         # (TB,1); ==1 for 1<=len<=S

  # ---- continuous branch: per-token layer-1 + ReLU, pooled layer-2 ----
  cp = cont_p_ref[...].reshape(TB * S, 3)
  cc = cont_c_ref[...].reshape(TB * S, 2)
  h = jnp.maximum(
      jnp.dot(cp, w1p_ref[...], preferred_element_type=f32)
      + jnp.dot(cc, w1c_ref[...], preferred_element_type=f32)
      + b1_ref[...], 0.0).reshape(TB, S, D2)                   # (TB,S,64)
  pooled_h = jnp.sum(h * mask_w[:, :, None], axis=1)           # (TB,64)
  cont_pooled = (jnp.dot(pooled_h, w2_ref[...], preferred_element_type=f32)
                 + b2_ref[...] * bias_scale)                   # (TB,64)

  # ---- categorical branch: weighted multi-hot "count", one table matmul ----
  catp = cat_p_ref[...]                                        # (TB,S,5) i32
  catc = cat_c_ref[...]                                        # (TB,S,2) i32
  lane = jax.lax.broadcasted_iota(jnp.int32, (TB, S, TAB_ROWS), 2)
  mh = catp[:, :, 0:1] == lane                                 # gender (offset 0)
  for c, off in enumerate(_P_OFFSETS[1:], start=1):            # korean..rep
    mh = mh | ((catp[:, :, c:c + 1] + off) == lane)
  for c, off in enumerate(_C_OFFSETS):                         # place, add
    mh = mh | ((catc[:, :, c:c + 1] + off) == lane)
  weighted_mh = jnp.where(mh, mask_w[:, :, None], 0.0)         # single select, no per-cmp cast
  pooled_mh = jnp.sum(weighted_mh, axis=1)                     # (TB,128)
  cat_pooled = jnp.dot(pooled_mh, tab_ref[...],
                       preferred_element_type=f32)             # (TB,64) [cat_p|cat_c], pre-scaled

  # ---- final linear (128 -> 2), split by static ref slices, lane-dense store ----
  out_ref[...] = (
      jnp.dot(cat_pooled, wl_ref[0:D2, :], preferred_element_type=f32)
      + jnp.dot(cont_pooled, wl_ref[D2:OUTPUT_SIZE, :], preferred_element_type=f32)
      + bl_ref[...])


def init_params(key):
  ks = jax.random.split(key, 12)

  def lin(k, fin, fout):
    kw, kb = jax.random.split(k)
    scale = 1.0 / jnp.sqrt(fin)
    w = jax.random.uniform(kw, (fin, fout), jnp.float32, -scale, scale)
    b = jax.random.uniform(kb, (1, fout), jnp.float32, -scale, scale)
    return w, b

  def emb(k, vocab, dim):
    return jax.random.normal(k, (vocab, dim), jnp.float32)

  w1p, b1p = lin(ks[0], 3, EMB_DIM)
  w2p, b2p = lin(ks[1], EMB_DIM, EMB_DIM)
  w1c, b1c = lin(ks[2], 2, EMB_DIM)
  w2c, b2c = lin(ks[3], EMB_DIM, EMB_DIM)
  tg = emb(ks[4], 2, EMB_DIM)
  tk = emb(ks[5], 2, EMB_DIM)
  tpr = emb(ks[6], 2, EMB_DIM)
  tj = emb(ks[7], 11, EMB_DIM)
  trp = emb(ks[8], 34, EMB_DIM)
  tpl = emb(ks[9], 19, EMB_DIM)
  tad = emb(ks[10], 31, EMB_DIM)
  wl, bl = lin(ks[11], OUTPUT_SIZE, OUT_CHANNELS)
  return (w1p, b1p, w2p, b2p, w1c, b1c, w2c, b2c,
          tg, tk, tpr, tj, trp, tpl, tad, wl, bl)


def pack_params(params):
  """One-time weight packing (call once at init, NOT per forward)."""
  (w1p, b1p, w2p, b2p, w1c, b1c, w2c, b2c,
   tg, tk, tpr, tj, trp, tpl, tad, wl, bl) = params
  f32 = jnp.float32

  # layer-1: p-branch -> cols 0..31, c-branch -> cols 32..63 (no input packing needed)
  W1P = jnp.zeros((3, D2), f32).at[:, :EMB_DIM].set(w1p)
  W1C = jnp.zeros((2, D2), f32).at[:, EMB_DIM:].set(w1c)
  B1 = jnp.concatenate([b1p, b1c], axis=1)                      # (1,64)

  # block-diagonal layer-2
  W2 = jnp.zeros((D2, D2), f32)
  W2 = W2.at[:EMB_DIM, :EMB_DIM].set(w2p).at[EMB_DIM:, EMB_DIM:].set(w2c)
  B2 = jnp.concatenate([b2p, b2c], axis=1)                      # (1,64)

  # fused embedding table: p-tables -> cols 0..31 scaled 1/5, c-tables -> 32..63 scaled 1/2
  TAB = jnp.zeros((TAB_ROWS, D2), f32)
  off = 0
  for t in (tg, tk, tpr, tj, trp):
    TAB = TAB.at[off:off + t.shape[0], :EMB_DIM].set(t / 5.0)
    off += t.shape[0]
  for t in (tpl, tad):
    TAB = TAB.at[off:off + t.shape[0], EMB_DIM:].set(t / 2.0)
    off += t.shape[0]

  # final linear (128->2), padded to 128 output lanes for a lane-dense store
  WL = jnp.zeros((OUTPUT_SIZE, OUT_PAD), f32).at[:, :OUT_CHANNELS].set(wl)
  BL = jnp.zeros((1, OUT_PAD), f32).at[:, :OUT_CHANNELS].set(bl)
  return W1P, W1C, B1, W2, B2, TAB, WL, BL


def linear_regression_forward(packed_w, cont_p, cont_c, cat_p, cat_c, val_len,
                              diff_days, *, block_b=128):
  del diff_days  # disable_pe=True -> positional embedding not used
  B, S, _ = cont_p.shape
  f32, i32 = jnp.float32, jnp.int32

  # batch block size: multiple of 8, capped at block_b (size against scoped VMEM
  # per generation; for v7x also prefer >=2 grid blocks so both TCs get work).
  TB = min(block_b, _round_up(B, 8))
  Bp = _round_up(B, TB)
  grid = (Bp // TB,)

  cont_p = cont_p.astype(f32)
  cont_c = cont_c.astype(f32)
  cat_p = cat_p.astype(i32)
  cat_c = cat_c.astype(i32)
  vlen = val_len.reshape(B, 1).astype(i32)
  if Bp != B:  # pad batch to a multiple of TB (no-op for realistic B % TB == 0)
    pad = Bp - B
    cont_p = jnp.pad(cont_p, ((0, pad), (0, 0), (0, 0)))
    cont_c = jnp.pad(cont_c, ((0, pad), (0, 0), (0, 0)))
    cat_p = jnp.pad(cat_p, ((0, pad), (0, 0), (0, 0)))
    cat_c = jnp.pad(cat_c, ((0, pad), (0, 0), (0, 0)))
    vlen = jnp.pad(vlen, ((0, pad), (0, 0)), constant_values=1)

  def row3(width):
    return pl.BlockSpec((TB, S, width), lambda i: (i, 0, 0))

  def resident(arr):  # weights: full-extent block, constant index -> stays in VMEM
    return pl.BlockSpec(arr.shape, lambda i: (0, 0))

  W1P, W1C, B1, W2, B2, TAB, WL, BL = packed_w
  out = pl.pallas_call(
      _linreg_kernel,
      out_shape=jax.ShapeDtypeStruct((Bp, OUT_PAD), f32),
      grid_spec=pltpu.PrefetchScalarGridSpec(
          num_scalar_prefetch=0,
          grid=grid,
          in_specs=[
              row3(3),                                   # cont_p
              row3(2),                                   # cont_c
              row3(5),                                   # cat_p
              row3(2),                                   # cat_c
              pl.BlockSpec((TB, 1), lambda i: (i, 0)),   # val_len
              resident(W1P), resident(W1C), resident(B1),
              resident(W2), resident(B2), resident(TAB),
              resident(WL), resident(BL),
          ],
          out_specs=pl.BlockSpec((TB, OUT_PAD), lambda i: (i, 0)),
      ),
      compiler_params=pltpu.CompilerParams(
          dimension_semantics=("parallel",)),
  )(cont_p, cont_c, cat_p, cat_c, vlen,
    W1P, W1C, B1, W2, B2, TAB, WL, BL)
  return out[:B, :OUT_CHANNELS]


def reference_forward(params, cont_p, cont_c, cat_p, cat_c, val_len, diff_days):
  (w1p, b1p, w2p, b2p, w1c, b1c, w2c, b2c,
   tg, tk, tpr, tj, trp, tpl, tad, wl, bl) = params
  cont_p_emb = jnp.maximum(cont_p @ w1p + b1p, 0.0) @ w2p + b2p
  cont_c_emb = jnp.maximum(cont_c @ w1c + b1c, 0.0) @ w2c + b2c
  a1 = tg[cat_p[..., 0]]; a2 = tk[cat_p[..., 1]]; a3 = tpr[cat_p[..., 2]]
  a4 = tj[cat_p[..., 3]]; a5 = trp[cat_p[..., 4]]
  a6 = tpl[cat_c[..., 0]]; a7 = tad[cat_c[..., 1]]
  cat_p_emb = (a1 + a2 + a3 + a4 + a5) / 5.0
  cat_c_emb = (a6 + a7) / 2.0
  x = jnp.concatenate([cat_p_emb, cat_c_emb, cont_p_emb, cont_c_emb], axis=2)
  S = x.shape[1]
  mask = (jnp.arange(S)[None, :, None] < val_len[:, None, None]).astype(jnp.float32)
  pooled = (x * mask).sum(axis=1) / val_len[:, None].astype(jnp.float32)
  return pooled @ wl + bl


if __name__ == "__main__":
  B, S = 2, 8
  key = jax.random.PRNGKey(0)
  k = jax.random.split(key, 10)

  cont_p = jax.random.normal(k[0], (B, S, 3), jnp.float32)
  cont_c = jax.random.normal(k[1], (B, S, 2), jnp.float32)
  cat_p = jnp.stack([
      jax.random.randint(k[2], (B, S), 0, 2),
      jax.random.randint(k[3], (B, S), 0, 2),
      jax.random.randint(k[4], (B, S), 0, 2),
      jax.random.randint(k[5], (B, S), 0, 11),
      jax.random.randint(k[6], (B, S), 0, 34),
  ], axis=-1).astype(jnp.int32)
  cat_c = jnp.stack([
      jax.random.randint(k[7], (B, S), 0, 19),
      jax.random.randint(k[8], (B, S), 0, 31),
  ], axis=-1).astype(jnp.int32)
  val_len = jnp.array([5, 8], dtype=jnp.int32)
  diff_days = jax.random.randint(k[9], (B, S, 1), 0, 5).astype(jnp.float32)

  params = init_params(jax.random.PRNGKey(42))
  packed = pack_params(params)           # one-time packing, outside the forward

  fwd = jax.jit(linear_regression_forward)
  out = fwd(packed, cont_p, cont_c, cat_p, cat_c, val_len, diff_days)
  out = jax.block_until_ready(out)

  ref = reference_forward(params, cont_p, cont_c, cat_p, cat_c, val_len, diff_days)
  assert out.shape == (B, OUT_CHANNELS), out.shape
  assert jnp.allclose(out, ref, atol=1e-4, rtol=1e-4), (out, ref)
  print("KERNEL_OK")
</pallas_src>

<mosaic_0001>
module attributes {stable_mosaic.version = 11 : i64} {
  func.func @_linreg_kernel(%arg0: i32, %arg1: memref<8x8x3xf32, #tpu.memory_space<vmem>>, %arg2: memref<8x8x2xf32, #tpu.memory_space<vmem>>, %arg3: memref<8x8x5xi32, #tpu.memory_space<vmem>>, %arg4: memref<8x8x2xi32, #tpu.memory_space<vmem>>, %arg5: memref<8x1xi32, #tpu.memory_space<vmem>>, %arg6: memref<3x64xf32, #tpu.memory_space<vmem>>, %arg7: memref<2x64xf32, #tpu.memory_space<vmem>>, %arg8: memref<1x64xf32, #tpu.memory_space<vmem>>, %arg9: memref<64x64xf32, #tpu.memory_space<vmem>>, %arg10: memref<1x64xf32, #tpu.memory_space<vmem>>, %arg11: memref<128x64xf32, #tpu.memory_space<vmem>>, %arg12: memref<128x128xf32, #tpu.memory_space<vmem>>, %arg13: memref<1x128xf32, #tpu.memory_space<vmem>>, %arg14: memref<8x128xf32, #tpu.memory_space<vmem>>) attributes {dimension_semantics = [#tpu.dimension_semantics<parallel>], iteration_bounds = array<i64: 1>, scalar_prefetch = 0 : i64, scratch_operands = 0 : i64, tpu.core_type = #tpu.core_type<tc>, window_params = [{transform_indices = @transform_0, window_bounds = array<i64: 8, 8, 3>}, {transform_indices = @transform_1, window_bounds = array<i64: 8, 8, 2>}, {transform_indices = @transform_2, window_bounds = array<i64: 8, 8, 5>}, {transform_indices = @transform_3, window_bounds = array<i64: 8, 8, 2>}, {transform_indices = @transform_4, window_bounds = array<i64: 8, 1>}, {pipeline_mode = #tpu.pipeline_mode<synchronous>, transform_indices = @transform_5, window_bounds = array<i64: 3, 64>}, {pipeline_mode = #tpu.pipeline_mode<synchronous>, transform_indices = @transform_6, window_bounds = array<i64: 2, 64>}, {pipeline_mode = #tpu.pipeline_mode<synchronous>, transform_indices = @transform_7, window_bounds = array<i64: 1, 64>}, {pipeline_mode = #tpu.pipeline_mode<synchronous>, transform_indices = @transform_8, window_bounds = array<i64: 64, 64>}, {pipeline_mode = #tpu.pipeline_mode<synchronous>, transform_indices = @transform_9, window_bounds = array<i64: 1, 64>}, {pipeline_mode = #tpu.pipeline_mode<synchronous>, transform_indices = @transform_10, window_bounds = array<i64: 128, 64>}, {pipeline_mode = #tpu.pipeline_mode<synchronous>, transform_indices = @transform_11, window_bounds = array<i64: 128, 128>}, {pipeline_mode = #tpu.pipeline_mode<synchronous>, transform_indices = @transform_12, window_bounds = array<i64: 1, 128>}, {transform_indices = @transform_13, window_bounds = array<i64: 8, 128>}]} {
    %c0 = arith.constant 0 : index
    %c0_0 = arith.constant 0 : index
    %0 = vector.load %arg5[%c0, %c0_0] : memref<8x1xi32, #tpu.memory_space<vmem>>, vector<8x1xi32>
    %1 = arith.sitofp %0 : vector<8x1xi32> to vector<8x1xf32>
    %cst = arith.constant 1.000000e+00 : f32
    %2 = vector.broadcast %cst : f32 to vector<8x1xf32>
    %3 = arith.maximumf %1, %2 : vector<8x1xf32>
    %cst_1 = arith.constant 1.000000e+00 : f32
    %4 = vector.broadcast %cst_1 : f32 to vector<8x1xf32>
    %5 = arith.divf %4, %3 : vector<8x1xf32>
    %6 = tpu.iota {dimensions = array<i32: 1>} : vector<8x8xi32>
    %7 = vector.broadcast %0 : vector<8x1xi32> to vector<8x8xi32>
    %8 = arith.cmpi slt, %6, %7 : vector<8x8xi32>
    %cst_2 = arith.constant 0.000000e+00 : f32
    %9 = vector.shape_cast %5 : vector<8x1xf32> to vector<8x1xf32>
    %10 = vector.broadcast %9 : vector<8x1xf32> to vector<8x8xf32>
    %11 = vector.broadcast %cst_2 : f32 to vector<8x8xf32>
    %12 = arith.select %8, %10, %11 : vector<8x8xi1>, vector<8x8xf32>
    %cst_3 = arith.constant dense<0.000000e+00> : vector<8xf32>
    %13 = vector.multi_reduction <add>, %12, %cst_3 [1] : vector<8x8xf32> to vector<8xf32>
    %14 = vector.shape_cast %13 : vector<8xf32> to vector<8x1xf32>
    %c0_4 = arith.constant 0 : index
    %c0_5 = arith.constant 0 : index
    %c0_6 = arith.constant 0 : index
    %15 = vector.load %arg1[%c0_4, %c0_5, %c0_6] : memref<8x8x3xf32, #tpu.memory_space<vmem>>, vector<8x8x3xf32>
    %16 = vector.shape_cast %15 : vector<8x8x3xf32> to vector<64x3xf32>
    %c0_7 = arith.constant 0 : index
    %c0_8 = arith.constant 0 : index
    %c0_9 = arith.constant 0 : index
    %17 = vector.load %arg2[%c0_7, %c0_8, %c0_9] : memref<8x8x2xf32, #tpu.memory_space<vmem>>, vector<8x8x2xf32>
    %18 = vector.shape_cast %17 : vector<8x8x2xf32> to vector<64x2xf32>
    %c0_10 = arith.constant 0 : index
    %c0_11 = arith.constant 0 : index
    %19 = vector.load %arg6[%c0_10, %c0_11] : memref<3x64xf32, #tpu.memory_space<vmem>>, vector<3x64xf32>
    %cst_12 = arith.constant dense<0.000000e+00> : vector<64x64xf32>
    %20 = tpu.matmul %16, %19, %cst_12 {dimension_numbers = #tpu.dot_dimension_numbers<[1], [0], [0], [1], [0, 0, 1, 1], [], []>} : vector<64x3xf32>, vector<3x64xf32>, vector<64x64xf32> -> vector<64x64xf32>
    %c0_13 = arith.constant 0 : index
    %c0_14 = arith.constant 0 : index
    %21 = vector.load %arg7[%c0_13, %c0_14] : memref<2x64xf32, #tpu.memory_space<vmem>>, vector<2x64xf32>
    %cst_15 = arith.constant dense<0.000000e+00> : vector<64x64xf32>
    %22 = tpu.matmul %18, %21, %cst_15 {dimension_numbers = #tpu.dot_dimension_numbers<[1], [0], [0], [1], [0, 0, 1, 1], [], []>} : vector<64x2xf32>, vector<2x64xf32>, vector<64x64xf32> -> vector<64x64xf32>
    %23 = arith.addf %20, %22 : vector<64x64xf32>
    %c0_16 = arith.constant 0 : index
    %c0_17 = arith.constant 0 : index
    %24 = vector.load %arg8[%c0_16, %c0_17] : memref<1x64xf32, #tpu.memory_space<vmem>>, vector<1x64xf32>
    %25 = vector.broadcast %24 : vector<1x64xf32> to vector<64x64xf32>
    %26 = arith.addf %23, %25 : vector<64x64xf32>
    %cst_18 = arith.constant 0.000000e+00 : f32
    %27 = vector.broadcast %cst_18 : f32 to vector<64x64xf32>
    %28 = arith.maximumf %26, %27 : vector<64x64xf32>
    %29 = vector.shape_cast %28 : vector<64x64xf32> to vector<8x8x64xf32>
    %30 = vector.shape_cast %12 : vector<8x8xf32> to vector<8x8x1xf32>
    %31 = vector.broadcast %30 : vector<8x8x1xf32> to vector<8x8x64xf32>
    %32 = arith.mulf %29, %31 : vector<8x8x64xf32>
    %cst_19 = arith.constant dense<0.000000e+00> : vector<8x64xf32>
    %33 = vector.multi_reduction <add>, %32, %cst_19 [1] : vector<8x8x64xf32> to vector<8x64xf32>
    %c0_20 = arith.constant 0 : index
    %c0_21 = arith.constant 0 : index
    %34 = vector.load %arg9[%c0_20, %c0_21] : memref<64x64xf32, #tpu.memory_space<vmem>>, vector<64x64xf32>
    %cst_22 = arith.constant dense<0.000000e+00> : vector<8x64xf32>
    %35 = tpu.matmul %33, %34, %cst_22 {dimension_numbers = #tpu.dot_dimension_numbers<[1], [0], [0], [1], [0, 0, 1, 1], [], []>} : vector<8x64xf32>, vector<64x64xf32>, vector<8x64xf32> -> vector<8x64xf32>
    %c0_23 = arith.constant 0 : index
    %c0_24 = arith.constant 0 : index
    %36 = vector.load %arg10[%c0_23, %c0_24] : memref<1x64xf32, #tpu.memory_space<vmem>>, vector<1x64xf32>
    %37 = vector.broadcast %36 : vector<1x64xf32> to vector<8x64xf32>
    %38 = vector.broadcast %14 : vector<8x1xf32> to vector<8x64xf32>
    %39 = arith.mulf %37, %38 : vector<8x64xf32>
    %40 = arith.addf %35, %39 : vector<8x64xf32>
    %c0_25 = arith.constant 0 : index
    %c0_26 = arith.constant 0 : index
    %c0_27 = arith.constant 0 : index
    %41 = vector.load %arg3[%c0_25, %c0_26, %c0_27] : memref<8x8x5xi32, #tpu.memory_space<vmem>>, vector<8x8x5xi32>
    %c0_28 = arith.constant 0 : index
    %c0_29 = arith.constant 0 : index
    %c0_30 = arith.constant 0 : index
    %42 = vector.load %arg4[%c0_28, %c0_29, %c0_30] : memref<8x8x2xi32, #tpu.memory_space<vmem>>, vector<8x8x2xi32>
    %43 = tpu.iota {dimensions = array<i32: 2>} : vector<8x8x128xi32>
    %44 = vector.extract_strided_slice %41 {offsets = [0, 0, 0], sizes = [8, 8, 1], strides = [1, 1, 1]} : vector<8x8x5xi32> to vector<8x8x1xi32>
    %45 = vector.broadcast %44 : vector<8x8x1xi32> to vector<8x8x128xi32>
    %46 = arith.cmpi eq, %45, %43 : vector<8x8x128xi32>
    %47 = vector.extract_strided_slice %41 {offsets = [0, 0, 1], sizes = [8, 8, 1], strides = [1, 1, 1]} : vector<8x8x5xi32> to vector<8x8x1xi32>
    %c2_i32 = arith.constant 2 : i32
    %48 = vector.broadcast %c2_i32 : i32 to vector<8x8x1xi32>
    %49 = arith.addi %47, %48 : vector<8x8x1xi32>
    %50 = vector.broadcast %49 : vector<8x8x1xi32> to vector<8x8x128xi32>
    %51 = arith.cmpi eq, %50, %43 : vector<8x8x128xi32>
    %52 = arith.ori %46, %51 : vector<8x8x128xi1>
    %53 = vector.extract_strided_slice %41 {offsets = [0, 0, 2], sizes = [8, 8, 1], strides = [1, 1, 1]} : vector<8x8x5xi32> to vector<8x8x1xi32>
    %c4_i32 = arith.constant 4 : i32
    %54 = vector.broadcast %c4_i32 : i32 to vector<8x8x1xi32>
    %55 = arith.addi %53, %54 : vector<8x8x1xi32>
    %56 = vector.broadcast %55 : vector<8x8x1xi32> to vector<8x8x128xi32>
    %57 = arith.cmpi eq, %56, %43 : vector<8x8x128xi32>
    %58 = arith.ori %52, %57 : vector<8x8x128xi1>
    %59 = vector.extract_strided_slice %41 {offsets = [0, 0, 3], sizes = [8, 8, 1], strides = [1, 1, 1]} : vector<8x8x5xi32> to vector<8x8x1xi32>
    %c6_i32 = arith.constant 6 : i32
    %60 = vector.broadcast %c6_i32 : i32 to vector<8x8x1xi32>
    %61 = arith.addi %59, %60 : vector<8x8x1xi32>
    %62 = vector.broadcast %61 : vector<8x8x1xi32> to vector<8x8x128xi32>
    %63 = arith.cmpi eq, %62, %43 : vector<8x8x128xi32>
    %64 = arith.ori %58, %63 : vector<8x8x128xi1>
    %65 = vector.extract_strided_slice %41 {offsets = [0, 0, 4], sizes = [8, 8, 1], strides = [1, 1, 1]} : vector<8x8x5xi32> to vector<8x8x1xi32>
    %c17_i32 = arith.constant 17 : i32
    %66 = vector.broadcast %c17_i32 : i32 to vector<8x8x1xi32>
    %67 = arith.addi %65, %66 : vector<8x8x1xi32>
    %68 = vector.broadcast %67 : vector<8x8x1xi32> to vector<8x8x128xi32>
    %69 = arith.cmpi eq, %68, %43 : vector<8x8x128xi32>
    %70 = arith.ori %64, %69 : vector<8x8x128xi1>
    %71 = vector.extract_strided_slice %42 {offsets = [0, 0, 0], sizes = [8, 8, 1], strides = [1, 1, 1]} : vector<8x8x2xi32> to vector<8x8x1xi32>
    %c51_i32 = arith.constant 51 : i32
    %72 = vector.broadcast %c51_i32 : i32 to vector<8x8x1xi32>
    %73 = arith.addi %71, %72 : vector<8x8x1xi32>
    %74 = vector.broadcast %73 : vector<8x8x1xi32> to vector<8x8x128xi32>
    %75 = arith.cmpi eq, %74, %43 : vector<8x8x128xi32>
    %76 = arith.ori %70, %75 : vector<8x8x128xi1>
    %77 = vector.extract_strided_slice %42 {offsets = [0, 0, 1], sizes = [8, 8, 1], strides = [1, 1, 1]} : vector<8x8x2xi32> to vector<8x8x1xi32>
    %c70_i32 = arith.constant 70 : i32
    %78 = vector.broadcast %c70_i32 : i32 to vector<8x8x1xi32>
    %79 = arith.addi %77, %78 : vector<8x8x1xi32>
    %80 = vector.broadcast %79 : vector<8x8x1xi32> to vector<8x8x128xi32>
    %81 = arith.cmpi eq, %80, %43 : vector<8x8x128xi32>
    %82 = arith.ori %76, %81 : vector<8x8x128xi1>
    %83 = vector.shape_cast %12 : vector<8x8xf32> to vector<8x8x1xf32>
    %cst_31 = arith.constant 0.000000e+00 : f32
    %84 = vector.shape_cast %83 : vector<8x8x1xf32> to vector<8x8x1xf32>
    %85 = vector.broadcast %84 : vector<8x8x1xf32> to vector<8x8x128xf32>
    %86 = vector.broadcast %cst_31 : f32 to vector<8x8x128xf32>
    %87 = arith.select %82, %85, %86 : vector<8x8x128xi1>, vector<8x8x128xf32>
    %cst_32 = arith.constant dense<0.000000e+00> : vector<8x128xf32>
    %88 = vector.multi_reduction <add>, %87, %cst_32 [1] : vector<8x8x128xf32> to vector<8x128xf32>
    %c0_33 = arith.constant 0 : index
    %c0_34 = arith.constant 0 : index
    %89 = vector.load %arg11[%c0_33, %c0_34] : memref<128x64xf32, #tpu.memory_space<vmem>>, vector<128x64xf32>
    %cst_35 = arith.constant dense<0.000000e+00> : vector<8x64xf32>
    %90 = tpu.matmul %88, %89, %cst_35 {dimension_numbers = #tpu.dot_dimension_numbers<[1], [0], [0], [1], [0, 0, 1, 1], [], []>} : vector<8x128xf32>, vector<128x64xf32>, vector<8x64xf32> -> vector<8x64xf32>
    %c0_36 = arith.constant 0 : index
    %c0_37 = arith.constant 0 : index
    %91 = vector.load %arg12[%c0_36, %c0_37] : memref<128x128xf32, #tpu.memory_space<vmem>>, vector<64x128xf32>
    %cst_38 = arith.constant dense<0.000000e+00> : vector<8x128xf32>
    %92 = tpu.matmul %90, %91, %cst_38 {dimension_numbers = #tpu.dot_dimension_numbers<[1], [0], [0], [1], [0, 0, 1, 1], [], []>} : vector<8x64xf32>, vector<64x128xf32>, vector<8x128xf32> -> vector<8x128xf32>
    %c64 = arith.constant 64 : index
    %c0_39 = arith.constant 0 : index
    %93 = vector.load %arg12[%c64, %c0_39] : memref<128x128xf32, #tpu.memory_space<vmem>>, vector<64x128xf32>
    %cst_40 = arith.constant dense<0.000000e+00> : vector<8x128xf32>
    %94 = tpu.matmul %40, %93, %cst_40 {dimension_numbers = #tpu.dot_dimension_numbers<[1], [0], [0], [1], [0, 0, 1, 1], [], []>} : vector<8x64xf32>, vector<64x128xf32>, vector<8x128xf32> -> vector<8x128xf32>
    %95 = arith.addf %92, %94 : vector<8x128xf32>
    %c0_41 = arith.constant 0 : index
    %c0_42 = arith.constant 0 : index
    %96 = vector.load %arg13[%c0_41, %c0_42] : memref<1x128xf32, #tpu.memory_space<vmem>>, vector<1x128xf32>
    %97 = vector.broadcast %96 : vector<1x128xf32> to vector<8x128xf32>
    %98 = arith.addf %95, %97 : vector<8x128xf32>
    %c0_43 = arith.constant 0 : index
    %c0_44 = arith.constant 0 : index
    %99 = vector.load %arg14[%c0_43, %c0_44] : memref<8x128xf32, #tpu.memory_space<vmem>>, vector<8x128xf32>
    tpu.vector_store %arg14[%c0_43, %c0_44], %98 {strides = array<i32>} : memref<8x128xf32, #tpu.memory_space<vmem>>, vector<8x128xf32>,
    return
  }
  func.func @transform_0(%arg0: i32) -> (i32, i32, i32) {
    %c0_i32 = arith.constant 0 : i32
    %c0_i32_0 = arith.constant 0 : i32
    %c0_i32_1 = arith.constant 0 : i32
    return %arg0, %c0_i32, %c0_i32_0 : i32, i32, i32
  }
  func.func @transform_1(%arg0: i32) -> (i32, i32, i32) {
    %c0_i32 = arith.constant 0 : i32
    %c0_i32_0 = arith.constant 0 : i32
    %c0_i32_1 = arith.constant 0 : i32
    return %arg0, %c0_i32, %c0_i32_0 : i32, i32, i32
  }
  func.func @transform_2(%arg0: i32) -> (i32, i32, i32) {
    %c0_i32 = arith.constant 0 : i32
    %c0_i32_0 = arith.constant 0 : i32
    %c0_i32_1 = arith.constant 0 : i32
    return %arg0, %c0_i32, %c0_i32_0 : i32, i32, i32
  }
  func.func @transform_3(%arg0: i32) -> (i32, i32, i32) {
    %c0_i32 = arith.constant 0 : i32
    %c0_i32_0 = arith.constant 0 : i32
    %c0_i32_1 = arith.constant 0 : i32
    return %arg0, %c0_i32, %c0_i32_0 : i32, i32, i32
  }
  func.func @transform_4(%arg0: i32) -> (i32, i32) {
    %c0_i32 = arith.constant 0 : i32
    %c0_i32_0 = arith.constant 0 : i32
    return %arg0, %c0_i32 : i32, i32
  }
  func.func @transform_5(%arg0: i32) -> (i32, i32) {
    %c0_i32 = arith.constant 0 : i32
    %c0_i32_0 = arith.constant 0 : i32
    %c0_i32_1 = arith.constant 0 : i32
    return %c0_i32, %c0_i32_0 : i32, i32
  }
  func.func @transform_6(%arg0: i32) -> (i32, i32) {
    %c0_i32 = arith.constant 0 : i32
    %c0_i32_0 = arith.constant 0 : i32
    %c0_i32_1 = arith.constant 0 : i32
    return %c0_i32, %c0_i32_0 : i32, i32
  }
  func.func @transform_7(%arg0: i32) -> (i32, i32) {
    %c0_i32 = arith.constant 0 : i32
    %c0_i32_0 = arith.constant 0 : i32
    %c0_i32_1 = arith.constant 0 : i32
    return %c0_i32, %c0_i32_0 : i32, i32
  }
  func.func @transform_8(%arg0: i32) -> (i32, i32) {
    %c0_i32 = arith.constant 0 : i32
    %c0_i32_0 = arith.constant 0 : i32
    %c0_i32_1 = arith.constant 0 : i32
    return %c0_i32, %c0_i32_0 : i32, i32
  }
  func.func @transform_9(%arg0: i32) -> (i32, i32) {
    %c0_i32 = arith.constant 0 : i32
    %c0_i32_0 = arith.constant 0 : i32
    %c0_i32_1 = arith.constant 0 : i32
    return %c0_i32, %c0_i32_0 : i32, i32
  }
  func.func @transform_10(%arg0: i32) -> (i32, i32) {
    %c0_i32 = arith.constant 0 : i32
    %c0_i32_0 = arith.constant 0 : i32
    %c0_i32_1 = arith.constant 0 : i32
    return %c0_i32, %c0_i32_0 : i32, i32
  }
  func.func @transform_11(%arg0: i32) -> (i32, i32) {
    %c0_i32 = arith.constant 0 : i32
    %c0_i32_0 = arith.constant 0 : i32
    %c0_i32_1 = arith.constant 0 : i32
    return %c0_i32, %c0_i32_0 : i32, i32
  }
  func.func @transform_12(%arg0: i32) -> (i32, i32) {
    %c0_i32 = arith.constant 0 : i32
    %c0_i32_0 = arith.constant 0 : i32
    %c0_i32_1 = arith.constant 0 : i32
    return %c0_i32, %c0_i32_0 : i32, i32
  }
  func.func @transform_13(%arg0: i32) -> (i32, i32) {
    %c0_i32 = arith.constant 0 : i32
    %c0_i32_0 = arith.constant 0 : i32
    return %arg0, %c0_i32 : i32, i32
  }
}

</mosaic_0001>

<llo_original>
// kernel: linear_regression_forward.1
$region0: #{linear_regression_forward.1}
  #allocation0 [shape = 'u32[]', space=smem, size = 0x4, offset = 0x4, fixed_abs, tag = 'smem constant byte address 0x4 - core index']
  #allocation1 [shape = 'u32[72,128]{1,0:T(1,128)}', space=vmem, size = 0x9000, scoped, tag = 'internal scratch']
  %s0 = inlined_call_operand.vmem [shape: f32[8,8,3], index: 0, kind: input, shape index: {}]
  %s1 = inlined_call_operand.vmem [shape: f32[8,8,2], index: 1, kind: input, shape index: {}]
  %s2 = inlined_call_operand.vmem [shape: s32[8,8,5], index: 2, kind: input, shape index: {}]
  %s3 = inlined_call_operand.vmem [shape: s32[8,8,2], index: 3, kind: input, shape index: {}]
  %s4 = inlined_call_operand.vmem [shape: s32[8,1], index: 4, kind: input, shape index: {}]
  %s5 = inlined_call_operand.vmem [shape: f32[3,64], index: 5, kind: input, shape index: {}]
  %s6 = inlined_call_operand.vmem [shape: f32[2,64], index: 6, kind: input, shape index: {}]
  %s7 = inlined_call_operand.vmem [shape: f32[1,64], index: 7, kind: input, shape index: {}]
  %s8 = inlined_call_operand.vmem [shape: f32[64,64], index: 8, kind: input, shape index: {}]
  %s9 = inlined_call_operand.vmem [shape: f32[1,64], index: 9, kind: input, shape index: {}]
  %s10 = inlined_call_operand.vmem [shape: f32[128,64], index: 10, kind: input, shape index: {}]
  %s11 = inlined_call_operand.vmem [shape: f32[128,128], index: 11, kind: input, shape index: {}]
  %s12 = inlined_call_operand.vmem [shape: f32[1,128], index: 12, kind: input, shape index: {}]
  %s13 = inlined_call_operand.vmem [shape: f32[8,128], index: 13, kind: output, shape index: {}]
  %s14 = sld [smem:[#allocation0]]
  $region62: #{linear_regression_forward.1} parent=0
    _
  %s16 = ssub.s32 1, %s14
  %s17 = scalar_select 0, %s16, %s14
  // Predicated region
  $region2: #{linear_regression_forward.1} parent=0 // pred_check
    _
  $region3: #{linear_regression_forward.1} parent=0 // pred_check_branch
    %19 = sbr.rel (0) target = $region5
  $region4: #{linear_regression_forward.1} parent=0 // pred_region
    _
  $region5: #{linear_regression_forward.1} parent=0 // pred_fallthru
    _
  // Predicated region
  $region6: #{linear_regression_forward.1} parent=0 // pred_check
    _
  $region7: #{linear_regression_forward.1} parent=0 // pred_check_branch
    %21 = sbr.rel (0) target = $region9
  $region8: #{linear_regression_forward.1} parent=0 // pred_region
    _
  $region9: #{linear_regression_forward.1} parent=0 // pred_fallthru
    _
  // Predicated region
  $region10: #{linear_regression_forward.1} parent=0 // pred_check
    _
  $region11: #{linear_regression_forward.1} parent=0 // pred_check_branch
    %23 = sbr.rel (0) target = $region13
  $region12: #{linear_regression_forward.1} parent=0 // pred_region
    _
  $region13: #{linear_regression_forward.1} parent=0 // pred_fallthru
    _
  // Predicated region
  $region14: #{linear_regression_forward.1} parent=0 // pred_check
    _
  $region15: #{linear_regression_forward.1} parent=0 // pred_check_branch
    %25 = sbr.rel (0) target = $region17
  $region16: #{linear_regression_forward.1} parent=0 // pred_region
    _
  $region17: #{linear_regression_forward.1} parent=0 // pred_fallthru
    _
  // Predicated region
  $region18: #{linear_regression_forward.1} parent=0 // pred_check
    _
  $region19: #{linear_regression_forward.1} parent=0 // pred_check_branch
    %27 = sbr.rel (0) target = $region21
  $region20: #{linear_regression_forward.1} parent=0 // pred_region
    _
  $region21: #{linear_regression_forward.1} parent=0 // pred_fallthru
    _
  // Predicated region
  $region22: #{linear_regression_forward.1} parent=0 // pred_check
    _
  $region23: #{linear_regression_forward.1} parent=0 // pred_check_branch
    %29 = sbr.rel (0) target = $region25
  $region24: #{linear_regression_forward.1} parent=0 // pred_region
    _
  $region25: #{linear_regression_forward.1} parent=0 // pred_fallthru
    _
  // Predicated region
  $region26: #{linear_regression_forward.1} parent=0 // pred_check
    _
  $region27: #{linear_regression_forward.1} parent=0 // pred_check_branch
    %31 = sbr.rel (0) target = $region29
  $region28: #{linear_regression_forward.1} parent=0 // pred_region
    _
  $region29: #{linear_regression_forward.1} parent=0 // pred_fallthru
    _
  // Predicated region
  $region30: #{linear_regression_forward.1} parent=0 // pred_check
    _
  $region31: #{linear_regression_forward.1} parent=0 // pred_check_branch
    %33 = sbr.rel (0) target = $region33
  $region32: #{linear_regression_forward.1} parent=0 // pred_region
    _
  $region33: #{linear_regression_forward.1} parent=0 // pred_fallthru
    _
  // Predicated region
  $region34: #{linear_regression_forward.1} parent=0 // pred_check
    _
  $region35: #{linear_regression_forward.1} parent=0 // pred_check_branch
    %35 = sbr.rel (0) target = $region37
  $region36: #{linear_regression_forward.1} parent=0 // pred_region
    _
  $region37: #{linear_regression_forward.1} parent=0 // pred_fallthru
    _
  // Predicated region
  $region38: #{linear_regression_forward.1} parent=0 // pred_check
    _
  $region39: #{linear_regression_forward.1} parent=0 // pred_check_branch
    %37 = sbr.rel (0) target = $region41
  $region40: #{linear_regression_forward.1} parent=0 // pred_region
    _
  $region41: #{linear_regression_forward.1} parent=0 // pred_fallthru
    _
  // Predicated region
  $region42: #{linear_regression_forward.1} parent=0 // pred_check
    _
  $region43: #{linear_regression_forward.1} parent=0 // pred_check_branch
    %39 = sbr.rel (0) target = $region45
  $region44: #{linear_regression_forward.1} parent=0 // pred_region
    _
  $region45: #{linear_regression_forward.1} parent=0 // pred_fallthru
    _
  // Predicated region
  $region46: #{linear_regression_forward.1} parent=0 // pred_check
    _
  $region47: #{linear_regression_forward.1} parent=0 // pred_check_branch
    %41 = sbr.rel (0) target = $region49
  $region48: #{linear_regression_forward.1} parent=0 // pred_region
    _
  $region49: #{linear_regression_forward.1} parent=0 // pred_fallthru
    _
  // Predicated region
  $region50: #{linear_regression_forward.1} parent=0 // pred_check
    _
  $region51: #{linear_regression_forward.1} parent=0 // pred_check_branch
    %43 = sbr.rel (0) target = $region53
  $region52: #{linear_regression_forward.1} parent=0 // pred_region
    _
  $region53: #{linear_regression_forward.1} parent=0 // pred_fallthru
    _
  %v44 = vld [vmem:[%s4] sm:$0xff]
  %v45 = vcvt.s32.f32 %v44
  %v46 = vmax.f32 %v45, 1.0
  %v47 = vrcp.pop %v46
  %v48 = vmul.f32 %v46, %v47
  %v49 = vsub.f32 1.0, %v48
  %v50 = vmul.f32 %v47, %v49
  %v51 = vadd.f32 %v47, %v50
  %vm52 = vweird.f32 %v46
  %vm53 = vweird.f32 %v47
  %vm54 = vmor %vm52, %vm53
  %v55 = vsel %vm54, %v47, %v51
  %v56 = vand.u32 2147483647, %v46
  %vm57 = vcmp.eq.f32.partialorder %v56, 8.507059e+37
  %v58 = vand.u32 %v46, 2147483648
  %v59 = vor.u32 1.1754944e-38, %v58
  %v60 = vsel %vm57, %v59, %v55
  %v61 = vmul.f32 1.0, %v60
  %v62 = vlaneseq
  %v63 = vand.u32 %v62, 127
  %64 = vset.pattern.permute.xlu0 0
  %65 = vperm.xlu0 %64, %v44
  %v66 = vpop.permute.xlu0 %65
  %vm67 = vcmp.lt.s32.totalorder %v63, %v66
  %69 = vset.pattern.permute.xlu0 0
  %70 = vperm.xlu0 %69, %v61
  %v71 = vpop.permute.xlu0 %70
  %v73 = vsel %vm67, %v71, 0.0
  %vm74 = vcmask 64512
  %v75 = vsel %vm74, %v73, 0.0
  %76 = vadd.xlane.f32.xlu0 %v75
  %v77 = vpop.xlane.xlu0 %76
  %v78 = vld [vmem:[%s0] sm:$0xff]
  %v79 = vld [vmem:[%s0 + $0x8] sm:$0xff]
  %v80 = vld [vmem:[%s0 + $0x10] sm:$0xff]
  %v81 = vld [vmem:[%s0 + $0x18] sm:$0xff]
  %v82 = vld [vmem:[%s0 + $0x20] sm:$0xff]
  %v83 = vld [vmem:[%s0 + $0x28] sm:$0xff]
  %v84 = vld [vmem:[%s0 + $0x30] sm:$0xff]
  %v85 = vld [vmem:[%s0 + $0x38] sm:$0xff]
  %v86 = vld [vmem:[%s1] sm:$0xff]
  %v87 = vld [vmem:[%s1 + $0x8] sm:$0xff]
  %v88 = vld [vmem:[%s1 + $0x10] sm:$0xff]
  %v89 = vld [vmem:[%s1 + $0x18] sm:$0xff]
  %v90 = vld [vmem:[%s1 + $0x20] sm:$0xff]
  %v91 = vld [vmem:[%s1 + $0x28] sm:$0xff]
  %v92 = vld [vmem:[%s1 + $0x30] sm:$0xff]
  %v93 = vld [vmem:[%s1 + $0x38] sm:$0xff]
  %v94 = vld [vmem:[%s5] sm:$0x7]
  %v95 = vld [vmem:[%s6] sm:$0x3]
  %vm96 = vcmask 15360
  %v98 = vsel %vm96, %v86, 0
  %v101 = vsel %vm96, %v87, 0
  %v104 = vsel %vm96, %v88, 0
  %v107 = vsel %vm96, %v89, 0
  %v110 = vsel %vm96, %v90, 0
  %v113 = vsel %vm96, %v91, 0
  %v116 = vsel %vm96, %v92, 0
  %v119 = vsel %vm96, %v93, 0
  %vm121 = vcmask 1041408
  %v123 = vsel %vm121, %v95, 0
  %125 = vmatpush.msra.mxu0 0.0
  %126 = vmatpush.msra.mxu0 0.0
  %127 = vmatpush.msra.mxu0 0.0
  %128 = vmatpush.msra.mxu0 0.0
  %129 = vmatpush.msra.mxu0 0.0
  %130 = vmatpush.msra.mxu0 0.0
  %131 = vmatpush.msra.mxu0 0.0
  %132 = vmatpush.msra.mxu0 0.0
  %133 = vmatpush.msra.mxu0 0.0
  %134 = vmatpush.msra.mxu0 0.0
  %135 = vmatpush.msra.mxu0 0.0
  %136 = vmatpush.msra.mxu0 0.0
  %137 = vmatpush.msra.mxu0 0.0
  %138 = vmatpush.msra.mxu0 0.0
  %139 = vmatpush.msra.mxu0 0.0
  %140 = vmatpush.msra.mxu0 %v123
  %141 = vmatmul.f32.gmra.mxu0 %v98
  %v142 = vpop.f32.mrf.mxu0
  %v143 = vadd.f32 0.0, %v142
  %144 = vmatmul.f32.gmra.mxu0 %v101
  %v145 = vpop.f32.mrf.mxu0
  %v146 = vadd.f32 0.0, %v145
  %147 = vmatmul.f32.gmra.mxu0 %v104
  %v148 = vpop.f32.mrf.mxu0
  %v149 = vadd.f32 0.0, %v148
  %150 = vmatmul.f32.gmra.mxu0 %v107
  %v151 = vpop.f32.mrf.mxu0
  %v152 = vadd.f32 0.0, %v151
  %153 = vmatmul.f32.gmra.mxu0 %v110
  %v154 = vpop.f32.mrf.mxu0
  %v155 = vadd.f32 0.0, %v154
  %156 = vmatmul.f32.gmra.mxu0 %v113
  %v157 = vpop.f32.mrf.mxu0
  %v158 = vadd.f32 0.0, %v157
  %159 = vmatmul.f32.gmra.mxu0 %v116
  %v160 = vpop.f32.mrf.mxu0
  %v161 = vadd.f32 0.0, %v160
  %162 = vmatmul.f32.gmra.mxu0 %v119
  %v163 = vpop.f32.mrf.mxu0
  %v164 = vadd.f32 0.0, %v163
  %165 = vdwg.mxu0
  %vm166 = vcmask 23552
  %v168 = vsel %vm166, %v78, 0
  %v171 = vsel %vm166, %v79, 0
  %v174 = vsel %vm166, %v80, 0
  %v177 = vsel %vm166, %v81, 0
  %v180 = vsel %vm166, %v82, 0
  %v183 = vsel %vm166, %v83, 0
  %v186 = vsel %vm166, %v84, 0
  %v189 = vsel %vm166, %v85, 0
  %vm191 = vcmask 1042432
  %v193 = vsel %vm191, %v94, 0
  %195 = vmatpush.msra.mxu0 0.0
  %196 = vmatpush.msra.mxu0 0.0
  %197 = vmatpush.msra.mxu0 0.0
  %198 = vmatpush.msra.mxu0 0.0
  %199 = vmatpush.msra.mxu0 0.0
  %200 = vmatpush.msra.mxu0 0.0
  %201 = vmatpush.msra.mxu0 0.0
  %202 = vmatpush.msra.mxu0 0.0
  %203 = vmatpush.msra.mxu0 0.0
  %204 = vmatpush.msra.mxu0 0.0
  %205 = vmatpush.msra.mxu0 0.0
  %206 = vmatpush.msra.mxu0 0.0
  %207 = vmatpush.msra.mxu0 0.0
  %208 = vmatpush.msra.mxu0 0.0
  %209 = vmatpush.msra.mxu0 0.0
  %210 = vmatpush.msra.mxu0 %v193
  %211 = vmatmul.f32.gmra.mxu0 %v168
  %v212 = vpop.f32.mrf.mxu0
  %v213 = vadd.f32 %v143, %v212
  %214 = vmatmul.f32.gmra.mxu0 %v171
  %v215 = vpop.f32.mrf.mxu0
  %v216 = vadd.f32 %v146, %v215
  %217 = vmatmul.f32.gmra.mxu0 %v174
  %v218 = vpop.f32.mrf.mxu0
  %v219 = vadd.f32 %v149, %v218
  %220 = vmatmul.f32.gmra.mxu0 %v177
  %v221 = vpop.f32.mrf.mxu0
  %v222 = vadd.f32 %v152, %v221
  %223 = vmatmul.f32.gmra.mxu0 %v180
  %v224 = vpop.f32.mrf.mxu0
  %v225 = vadd.f32 %v155, %v224
  %226 = vmatmul.f32.gmra.mxu0 %v183
  %v227 = vpop.f32.mrf.mxu0
  %v228 = vadd.f32 %v158, %v227
  %229 = vmatmul.f32.gmra.mxu0 %v186
  %v230 = vpop.f32.mrf.mxu0
  %v231 = vadd.f32 %v161, %v230
  %232 = vmatmul.f32.gmra.mxu0 %v189
  %v233 = vpop.f32.mrf.mxu0
  %v234 = vadd.f32 %v164, %v233
  %235 = vdwg.mxu0
  %v236 = vld [vmem:[%s7] sm:$0x1]
  %v238 = vperm.slane %v236, 0
  %v240 = vadd.f32 %v213, %v238
  %v241 = vadd.f32 %v216, %v238
  %v242 = vadd.f32 %v219, %v238
  %v243 = vadd.f32 %v222, %v238
  %v244 = vadd.f32 %v225, %v238
  %v245 = vadd.f32 %v228, %v238
  %v246 = vadd.f32 %v231, %v238
  %v247 = vadd.f32 %v234, %v238
  %v248 = vmax.f32 %v240, 0.0
  %v249 = vmax.f32 %v241, 0.0
  %v250 = vmax.f32 %v242, 0.0
  %v251 = vmax.f32 %v243, 0.0
  %v252 = vmax.f32 %v244, 0.0
  %v253 = vmax.f32 %v245, 0.0
  %v254 = vmax.f32 %v246, 0.0
  %v255 = vmax.f32 %v247, 0.0
  %v256 = vperm.slane %v73, 0
  %v257 = vlaneseq
  %v258 = vshrl.u32 %v257, 7
  %260 = vset.pattern.permute.xlu0 %v258
  %261 = vperm.xlu0 %260, %v256
  %v262 = vpop.permute.xlu0 %261
  %v263 = vperm.slane %v73, 1
  %v264 = vlaneseq
  %v265 = vshrl.u32 %v264, 7
  %267 = vset.pattern.permute.xlu0 %v265
  %268 = vperm.xlu0 %267, %v263
  %v269 = vpop.permute.xlu0 %268
  %v270 = vperm.slane %v73, 2
  %v271 = vlaneseq
  %v272 = vshrl.u32 %v271, 7
  %274 = vset.pattern.permute.xlu0 %v272
  %275 = vperm.xlu0 %274, %v270
  %v276 = vpop.permute.xlu0 %275
  %v277 = vperm.slane %v73, 3
  %v278 = vlaneseq
  %v279 = vshrl.u32 %v278, 7
  %281 = vset.pattern.permute.xlu0 %v279
  %282 = vperm.xlu0 %281, %v277
  %v283 = vpop.permute.xlu0 %282
  %v284 = vperm.slane %v73, 4
  %v285 = vlaneseq
  %v286 = vshrl.u32 %v285, 7
  %288 = vset.pattern.permute.xlu0 %v286
  %289 = vperm.xlu0 %288, %v284
  %v290 = vpop.permute.xlu0 %289
  %v291 = vperm.slane %v73, 5
  %v292 = vlaneseq
  %v293 = vshrl.u32 %v292, 7
  %295 = vset.pattern.permute.xlu0 %v293
  %296 = vperm.xlu0 %295, %v291
  %v297 = vpop.permute.xlu0 %296
  %v298 = vperm.slane %v73, 6
  %v299 = vlaneseq
  %v300 = vshrl.u32 %v299, 7
  %302 = vset.pattern.permute.xlu0 %v300
  %303 = vperm.xlu0 %302, %v298
  %v304 = vpop.permute.xlu0 %303
  %v305 = vperm.slane %v73, 7
  %v306 = vlaneseq
  %v307 = vshrl.u32 %v306, 7
  %309 = vset.pattern.permute.xlu0 %v307
  %310 = vperm.xlu0 %309, %v305
  %v311 = vpop.permute.xlu0 %310
  %v312 = vmul.f32 %v248, %v262
  %v313 = vmul.f32 %v249, %v269
  %v314 = vmul.f32 %v250, %v276
  %v315 = vmul.f32 %v251, %v283
  %v316 = vmul.f32 %v252, %v290
  %v317 = vmul.f32 %v253, %v297
  %v318 = vmul.f32 %v254, %v304
  %v319 = vmul.f32 %v255, %v311
  %vm320 = vcmask 523264
  %v321 = vsel %vm320, %v312, 0.0
  %v322 = vrot.slane %v321, 4
  %v323 = vadd.f32 %v321, %v322
  %v324 = vrot.slane %v323, 2
  %v325 = vadd.f32 %v323, %v324
  %v326 = vrot.slane %v325, 1
  %v327 = vadd.f32 %v325, %v326
  %v328 = vsel %vm320, %v313, 0.0
  %v329 = vrot.slane %v328, 4
  %v330 = vadd.f32 %v328, %v329
  %v331 = vrot.slane %v330, 2
  %v332 = vadd.f32 %v330, %v331
  %v333 = vrot.slane %v332, 1
  %v334 = vadd.f32 %v332, %v333
  %v335 = vsel %vm320, %v314, 0.0
  %v336 = vrot.slane %v335, 4
  %v337 = vadd.f32 %v335, %v336
  %v338 = vrot.slane %v337, 2
  %v339 = vadd.f32 %v337, %v338
  %v340 = vrot.slane %v339, 1
  %v341 = vadd.f32 %v339, %v340
  %v342 = vsel %vm320, %v315, 0.0
  %v343 = vrot.slane %v342, 4
  %v344 = vadd.f32 %v342, %v343
  %v345 = vrot.slane %v344, 2
  %v346 = vadd.f32 %v344, %v345
  %v347 = vrot.slane %v346, 1
  %v348 = vadd.f32 %v346, %v347
  %v349 = vsel %vm320, %v316, 0.0
  %v350 = vrot.slane %v349, 4
  %v351 = vadd.f32 %v349, %v350
  %v352 = vrot.slane %v351, 2
  %v353 = vadd.f32 %v351, %v352
  %v354 = vrot.slane %v353, 1
  %v355 = vadd.f32 %v353, %v354
  %v356 = vsel %vm320, %v317, 0.0
  %v357 = vrot.slane %v356, 4
  %v358 = vadd.f32 %v356, %v357
  %v359 = vrot.slane %v358, 2
  %v360 = vadd.f32 %v358, %v359
  %v361 = vrot.slane %v360, 1
  %v362 = vadd.f32 %v360, %v361
  %v363 = vsel %vm320, %v318, 0.0
  %v364 = vrot.slane %v363, 4
  %v365 = vadd.f32 %v363, %v364
  %v366 = vrot.slane %v365, 2
  %v367 = vadd.f32 %v365, %v366
  %v368 = vrot.slane %v367, 1
  %v369 = vadd.f32 %v367, %v368
  %v370 = vsel %vm320, %v319, 0.0
  %v371 = vrot.slane %v370, 4
  %v372 = vadd.f32 %v370, %v371
  %v373 = vrot.slane %v372, 2
  %v374 = vadd.f32 %v372, %v373
  %v375 = vrot.slane %v374, 1
  %v376 = vadd.f32 %v374, %v375
  %v377 = vld [vmem:[%s8] sm:$0xff]
  %v378 = vld [vmem:[%s8 + $0x8] sm:$0xff]
  %v379 = vld [vmem:[%s8 + $0x10] sm:$0xff]
  %v380 = vld [vmem:[%s8 + $0x18] sm:$0xff]
  %v381 = vld [vmem:[%s8 + $0x20] sm:$0xff]
  %v382 = vld [vmem:[%s8 + $0x28] sm:$0xff]
  %v383 = vld [vmem:[%s8 + $0x30] sm:$0xff]
  %v384 = vld [vmem:[%s8 + $0x38] sm:$0xff]
  %v385 = vld [vmem:[%s9] sm:$0x1]
  %v387 = vperm.slane %v385, 0
  %v389 = vmul.f32 %v387, %v77
  %vm398 = vcmask 1041409
  %v399 = vsel %vm398, %v334, %v327
  %vm400 = vcmask 1042434
  %v401 = vsel %vm400, %v341, %v399
  %vm402 = vcmask 1043459
  %v403 = vsel %vm402, %v348, %v401
  %vm404 = vcmask 1044484
  %v405 = vsel %vm404, %v355, %v403
  %vm406 = vcmask 1045509
  %v407 = vsel %vm406, %v362, %v405
  %vm408 = vcmask 1046534
  %v409 = vsel %vm408, %v369, %v407
  %vm410 = vcmask 1047559
  %v411 = vsel %vm410, %v376, %v409
  %v412 = vsel %vm320, %v411, 0
  %414 = vmatpush.msra.mxu0 0.0
  %415 = vmatpush.msra.mxu0 0.0
  %416 = vmatpush.msra.mxu0 0.0
  %417 = vmatpush.msra.mxu0 0.0
  %418 = vmatpush.msra.mxu0 0.0
  %419 = vmatpush.msra.mxu0 0.0
  %420 = vmatpush.msra.mxu0 0.0
  %421 = vmatpush.msra.mxu0 0.0
  %422 = vmatpush.msra.mxu0 %v384
  %423 = vmatpush.msra.mxu0 %v383
  %424 = vmatpush.msra.mxu0 %v382
  %425 = vmatpush.msra.mxu0 %v381
  %426 = vmatpush.msra.mxu0 %v380
  %427 = vmatpush.msra.mxu0 %v379
  %428 = vmatpush.msra.mxu0 %v378
  %429 = vmatpush.msra.mxu0 %v377
  %430 = vmatmul.f32.gmra.mxu0 %v412
  %v431 = vpop.f32.mrf.mxu0
  %v432 = vadd.f32 %v389, %v431
  %433 = vdwg.mxu0
  %v434 = vld [vmem:[%s2] sm:$0xff]
  %v435 = vld [vmem:[%s2 + $0x8] sm:$0xff]
  %v436 = vld [vmem:[%s2 + $0x10] sm:$0xff]
  %v437 = vld [vmem:[%s2 + $0x18] sm:$0xff]
  %v438 = vld [vmem:[%s2 + $0x20] sm:$0xff]
  %v439 = vld [vmem:[%s2 + $0x28] sm:$0xff]
  %v440 = vld [vmem:[%s2 + $0x30] sm:$0xff]
  %v441 = vld [vmem:[%s2 + $0x38] sm:$0xff]
  %v442 = vld [vmem:[%s3] sm:$0xff]
  %v443 = vld [vmem:[%s3 + $0x8] sm:$0xff]
  %v444 = vld [vmem:[%s3 + $0x10] sm:$0xff]
  %v445 = vld [vmem:[%s3 + $0x18] sm:$0xff]
  %v446 = vld [vmem:[%s3 + $0x20] sm:$0xff]
  %v447 = vld [vmem:[%s3 + $0x28] sm:$0xff]
  %v448 = vld [vmem:[%s3 + $0x30] sm:$0xff]
  %v449 = vld [vmem:[%s3 + $0x38] sm:$0xff]
  %450 = vset.pattern.permute.xlu0 0
  %451 = vperm.xlu0 %450, %v434
  %v452 = vpop.permute.xlu0 %451
  %453 = vset.pattern.permute.xlu0 0
  %454 = vperm.xlu0 %453, %v435
  %v455 = vpop.permute.xlu0 %454
  %456 = vset.pattern.permute.xlu0 0
  %457 = vperm.xlu0 %456, %v436
  %v458 = vpop.permute.xlu0 %457
  %459 = vset.pattern.permute.xlu0 0
  %460 = vperm.xlu0 %459, %v437
  %v461 = vpop.permute.xlu0 %460
  %462 = vset.pattern.permute.xlu0 0
  %463 = vperm.xlu0 %462, %v438
  %v464 = vpop.permute.xlu0 %463
  %465 = vset.pattern.permute.xlu0 0
  %466 = vperm.xlu0 %465, %v439
  %v467 = vpop.permute.xlu0 %466
  %468 = vset.pattern.permute.xlu0 0
  %469 = vperm.xlu0 %468, %v440
  %v470 = vpop.permute.xlu0 %469
  %471 = vset.pattern.permute.xlu0 0
  %472 = vperm.xlu0 %471, %v441
  %v473 = vpop.permute.xlu0 %472
  %vm474 = vcmp.eq.s32.totalorder %v452, %v63
  %vm475 = vcmp.eq.s32.totalorder %v455, %v63
  %vm476 = vcmp.eq.s32.totalorder %v458, %v63
  %vm477 = vcmp.eq.s32.totalorder %v461, %v63
  %vm478 = vcmp.eq.s32.totalorder %v464, %v63
  %vm479 = vcmp.eq.s32.totalorder %v467, %v63
  %vm480 = vcmp.eq.s32.totalorder %v470, %v63
  %vm481 = vcmp.eq.s32.totalorder %v473, %v63
  %v482 = vadd.s32 %v434, 2
  %v483 = vadd.s32 %v435, 2
  %v484 = vadd.s32 %v436, 2
  %v485 = vadd.s32 %v437, 2
  %v486 = vadd.s32 %v438, 2
  %v487 = vadd.s32 %v439, 2
  %v488 = vadd.s32 %v440, 2
  %v489 = vadd.s32 %v441, 2
  %490 = vset.pattern.permute.xlu0 1
  %491 = vperm.xlu0 %490, %v482
  %v492 = vpop.permute.xlu0 %491
  %493 = vset.pattern.permute.xlu0 1
  %494 = vperm.xlu0 %493, %v483
  %v495 = vpop.permute.xlu0 %494
  %496 = vset.pattern.permute.xlu0 1
  %497 = vperm.xlu0 %496, %v484
  %v498 = vpop.permute.xlu0 %497
  %499 = vset.pattern.permute.xlu0 1
  %500 = vperm.xlu0 %499, %v485
  %v501 = vpop.permute.xlu0 %500
  %502 = vset.pattern.permute.xlu0 1
  %503 = vperm.xlu0 %502, %v486
  %v504 = vpop.permute.xlu0 %503
  %505 = vset.pattern.permute.xlu0 1
  %506 = vperm.xlu0 %505, %v487
  %v507 = vpop.permute.xlu0 %506
  %508 = vset.pattern.permute.xlu0 1
  %509 = vperm.xlu0 %508, %v488
  %v510 = vpop.permute.xlu0 %509
  %511 = vset.pattern.permute.xlu0 1
  %512 = vperm.xlu0 %511, %v489
  %v513 = vpop.permute.xlu0 %512
  %vm514 = vcmp.eq.s32.totalorder %v492, %v63
  %vm515 = vcmp.eq.s32.totalorder %v495, %v63
  %vm516 = vcmp.eq.s32.totalorder %v498, %v63
  %vm517 = vcmp.eq.s32.totalorder %v501, %v63
  %vm518 = vcmp.eq.s32.totalorder %v504, %v63
  %vm519 = vcmp.eq.s32.totalorder %v507, %v63
  %vm520 = vcmp.eq.s32.totalorder %v510, %v63
  %vm521 = vcmp.eq.s32.totalorder %v513, %v63
  %vm522 = vmor %vm474, %vm514
  %vm523 = vmor %vm475, %vm515
  %vm524 = vmor %vm476, %vm516
  %vm525 = vmor %vm477, %vm517
  %vm526 = vmor %vm478, %vm518
  %vm527 = vmor %vm479, %vm519
  %vm528 = vmor %vm480, %vm520
  %vm529 = vmor %vm481, %vm521
  %v530 = vadd.s32 %v434, 4
  %v531 = vadd.s32 %v435, 4
  %v532 = vadd.s32 %v436, 4
  %v533 = vadd.s32 %v437, 4
  %v534 = vadd.s32 %v438, 4
  %v535 = vadd.s32 %v439, 4
  %v536 = vadd.s32 %v440, 4
  %v537 = vadd.s32 %v441, 4
  %538 = vset.pattern.permute.xlu0 2
  %539 = vperm.xlu0 %538, %v530
  %v540 = vpop.permute.xlu0 %539
  %541 = vset.pattern.permute.xlu0 2
  %542 = vperm.xlu0 %541, %v531
  %v543 = vpop.permute.xlu0 %542
  %544 = vset.pattern.permute.xlu0 2
  %545 = vperm.xlu0 %544, %v532
  %v546 = vpop.permute.xlu0 %545
  %547 = vset.pattern.permute.xlu0 2
  %548 = vperm.xlu0 %547, %v533
  %v549 = vpop.permute.xlu0 %548
  %550 = vset.pattern.permute.xlu0 2
  %551 = vperm.xlu0 %550, %v534
  %v552 = vpop.permute.xlu0 %551
  %553 = vset.pattern.permute.xlu0 2
  %554 = vperm.xlu0 %553, %v535
  %v555 = vpop.permute.xlu0 %554
  %556 = vset.pattern.permute.xlu0 2
  %557 = vperm.xlu0 %556, %v536
  %v558 = vpop.permute.xlu0 %557
  %559 = vset.pattern.permute.xlu0 2
  %560 = vperm.xlu0 %559, %v537
  %v561 = vpop.permute.xlu0 %560
  %vm562 = vcmp.eq.s32.totalorder %v540, %v63
  %vm563 = vcmp.eq.s32.totalorder %v543, %v63
  %vm564 = vcmp.eq.s32.totalorder %v546, %v63
  %vm565 = vcmp.eq.s32.totalorder %v549, %v63
  %vm566 = vcmp.eq.s32.totalorder %v552, %v63
  %vm567 = vcmp.eq.s32.totalorder %v555, %v63
  %vm568 = vcmp.eq.s32.totalorder %v558, %v63
  %vm569 = vcmp.eq.s32.totalorder %v561, %v63
  %vm570 = vmor %vm522, %vm562
  %vm571 = vmor %vm523, %vm563
  %vm572 = vmor %vm524, %vm564
  %vm573 = vmor %vm525, %vm565
  %vm574 = vmor %vm526, %vm566
  %vm575 = vmor %vm527, %vm567
  %vm576 = vmor %vm528, %vm568
  %vm577 = vmor %vm529, %vm569
  %v578 = vadd.s32 %v434, 6
  %v579 = vadd.s32 %v435, 6
  %v580 = vadd.s32 %v436, 6
  %v581 = vadd.s32 %v437, 6
  %v582 = vadd.s32 %v438, 6
  %v583 = vadd.s32 %v439, 6
  %v584 = vadd.s32 %v440, 6
  %v585 = vadd.s32 %v441, 6
  %586 = vset.pattern.permute.xlu0 3
  %587 = vperm.xlu0 %586, %v578
  %v588 = vpop.permute.xlu0 %587
  %589 = vset.pattern.permute.xlu0 3
  %590 = vperm.xlu0 %589, %v579
  %v591 = vpop.permute.xlu0 %590
  %592 = vset.pattern.permute.xlu0 3
  %593 = vperm.xlu0 %592, %v580
  %v594 = vpop.permute.xlu0 %593
  %595 = vset.pattern.permute.xlu0 3
  %596 = vperm.xlu0 %595, %v581
  %v597 = vpop.permute.xlu0 %596
  %598 = vset.pattern.permute.xlu0 3
  %599 = vperm.xlu0 %598, %v582
  %v600 = vpop.permute.xlu0 %599
  %601 = vset.pattern.permute.xlu0 3
  %602 = vperm.xlu0 %601, %v583
  %v603 = vpop.permute.xlu0 %602
  %604 = vset.pattern.permute.xlu0 3
  %605 = vperm.xlu0 %604, %v584
  %v606 = vpop.permute.xlu0 %605
  %607 = vset.pattern.permute.xlu0 3
  %608 = vperm.xlu0 %607, %v585
  %v609 = vpop.permute.xlu0 %608
  %vm610 = vcmp.eq.s32.totalorder %v588, %v63
  %vm611 = vcmp.eq.s32.totalorder %v591, %v63
  %vm612 = vcmp.eq.s32.totalorder %v594, %v63
  %vm613 = vcmp.eq.s32.totalorder %v597, %v63
  %vm614 = vcmp.eq.s32.totalorder %v600, %v63
  %vm615 = vcmp.eq.s32.totalorder %v603, %v63
  %vm616 = vcmp.eq.s32.totalorder %v606, %v63
  %vm617 = vcmp.eq.s32.totalorder %v609, %v63
  %vm618 = vmor %vm570, %vm610
  %vm619 = vmor %vm571, %vm611
  %vm620 = vmor %vm572, %vm612
  %vm621 = vmor %vm573, %vm613
  %vm622 = vmor %vm574, %vm614
  %vm623 = vmor %vm575, %vm615
  %vm624 = vmor %vm576, %vm616
  %vm625 = vmor %vm577, %vm617
  %v626 = vadd.s32 %v434, 17
  %v627 = vadd.s32 %v435, 17
  %v628 = vadd.s32 %v436, 17
  %v629 = vadd.s32 %v437, 17
  %v630 = vadd.s32 %v438, 17
  %v631 = vadd.s32 %v439, 17
  %v632 = vadd.s32 %v440, 17
  %v633 = vadd.s32 %v441, 17
  %634 = vset.pattern.permute.xlu0 4
  %635 = vperm.xlu0 %634, %v626
  %v636 = vpop.permute.xlu0 %635
  %637 = vset.pattern.permute.xlu0 4
  %638 = vperm.xlu0 %637, %v627
  %v639 = vpop.permute.xlu0 %638
  %640 = vset.pattern.permute.xlu0 4
  %641 = vperm.xlu0 %640, %v628
  %v642 = vpop.permute.xlu0 %641
  %643 = vset.pattern.permute.xlu0 4
  %644 = vperm.xlu0 %643, %v629
  %v645 = vpop.permute.xlu0 %644
  %646 = vset.pattern.permute.xlu0 4
  %647 = vperm.xlu0 %646, %v630
  %v648 = vpop.permute.xlu0 %647
  %649 = vset.pattern.permute.xlu0 4
  %650 = vperm.xlu0 %649, %v631
  %v651 = vpop.permute.xlu0 %650
  %652 = vset.pattern.permute.xlu0 4
  %653 = vperm.xlu0 %652, %v632
  %v654 = vpop.permute.xlu0 %653
  %655 = vset.pattern.permute.xlu0 4
  %656 = vperm.xlu0 %655, %v633
  %v657 = vpop.permute.xlu0 %656
  %vm658 = vcmp.eq.s32.totalorder %v636, %v63
  %vm659 = vcmp.eq.s32.totalorder %v639, %v63
  %vm660 = vcmp.eq.s32.totalorder %v642, %v63
  %vm661 = vcmp.eq.s32.totalorder %v645, %v63
  %vm662 = vcmp.eq.s32.totalorder %v648, %v63
  %vm663 = vcmp.eq.s32.totalorder %v651, %v63
  %vm664 = vcmp.eq.s32.totalorder %v654, %v63
  %vm665 = vcmp.eq.s32.totalorder %v657, %v63
  %vm666 = vmor %vm618, %vm658
  %vm667 = vmor %vm619, %vm659
  %vm668 = vmor %vm620, %vm660
  %vm669 = vmor %vm621, %vm661
  %vm670 = vmor %vm622, %vm662
  %vm671 = vmor %vm623, %vm663
  %vm672 = vmor %vm624, %vm664
  %vm673 = vmor %vm625, %vm665
  %v674 = vadd.s32 %v442, 51
  %v675 = vadd.s32 %v443, 51
  %v676 = vadd.s32 %v444, 51
  %v677 = vadd.s32 %v445, 51
  %v678 = vadd.s32 %v446, 51
  %v679 = vadd.s32 %v447, 51
  %v680 = vadd.s32 %v448, 51
  %v681 = vadd.s32 %v449, 51
  %682 = vset.pattern.permute.xlu0 0
  %683 = vperm.xlu0 %682, %v674
  %v684 = vpop.permute.xlu0 %683
  %685 = vset.pattern.permute.xlu0 0
  %686 = vperm.xlu0 %685, %v675
  %v687 = vpop.permute.xlu0 %686
  %688 = vset.pattern.permute.xlu0 0
  %689 = vperm.xlu0 %688, %v676
  %v690 = vpop.permute.xlu0 %689
  %691 = vset.pattern.permute.xlu0 0
  %692 = vperm.xlu0 %691, %v677
  %v693 = vpop.permute.xlu0 %692
  %694 = vset.pattern.permute.xlu0 0
  %695 = vperm.xlu0 %694, %v678
  %v696 = vpop.permute.xlu0 %695
  %697 = vset.pattern.permute.xlu0 0
  %698 = vperm.xlu0 %697, %v679
  %v699 = vpop.permute.xlu0 %698
  %700 = vset.pattern.permute.xlu0 0
  %701 = vperm.xlu0 %700, %v680
  %v702 = vpop.permute.xlu0 %701
  %703 = vset.pattern.permute.xlu0 0
  %704 = vperm.xlu0 %703, %v681
  %v705 = vpop.permute.xlu0 %704
  %vm706 = vcmp.eq.s32.totalorder %v684, %v63
  %vm707 = vcmp.eq.s32.totalorder %v687, %v63
  %vm708 = vcmp.eq.s32.totalorder %v690, %v63
  %vm709 = vcmp.eq.s32.totalorder %v693, %v63
  %vm710 = vcmp.eq.s32.totalorder %v696, %v63
  %vm711 = vcmp.eq.s32.totalorder %v699, %v63
  %vm712 = vcmp.eq.s32.totalorder %v702, %v63
  %vm713 = vcmp.eq.s32.totalorder %v705, %v63
  %vm714 = vmor %vm666, %vm706
  %vm715 = vmor %vm667, %vm707
  %vm716 = vmor %vm668, %vm708
  %vm717 = vmor %vm669, %vm709
  %vm718 = vmor %vm670, %vm710
  %vm719 = vmor %vm671, %vm711
  %vm720 = vmor %vm672, %vm712
  %vm721 = vmor %vm673, %vm713
  %v722 = vadd.s32 %v442, 70
  %v723 = vadd.s32 %v443, 70
  %v724 = vadd.s32 %v444, 70
  %v725 = vadd.s32 %v445, 70
  %v726 = vadd.s32 %v446, 70
  %v727 = vadd.s32 %v447, 70
  %v728 = vadd.s32 %v448, 70
  %v729 = vadd.s32 %v449, 70
  %730 = vset.pattern.permute.xlu0 1
  %731 = vperm.xlu0 %730, %v722
  %v732 = vpop.permute.xlu0 %731
  %733 = vset.pattern.permute.xlu0 1
  %734 = vperm.xlu0 %733, %v723
  %v735 = vpop.permute.xlu0 %734
  %736 = vset.pattern.permute.xlu0 1
  %737 = vperm.xlu0 %736, %v724
  %v738 = vpop.permute.xlu0 %737
  %739 = vset.pattern.permute.xlu0 1
  %740 = vperm.xlu0 %739, %v725
  %v741 = vpop.permute.xlu0 %740
  %742 = vset.pattern.permute.xlu0 1
  %743 = vperm.xlu0 %742, %v726
  %v744 = vpop.permute.xlu0 %743
  %745 = vset.pattern.permute.xlu0 1
  %746 = vperm.xlu0 %745, %v727
  %v747 = vpop.permute.xlu0 %746
  %748 = vset.pattern.permute.xlu0 1
  %749 = vperm.xlu0 %748, %v728
  %v750 = vpop.permute.xlu0 %749
  %751 = vset.pattern.permute.xlu0 1
  %752 = vperm.xlu0 %751, %v729
  %v753 = vpop.permute.xlu0 %752
  %vm754 = vcmp.eq.s32.totalorder %v732, %v63
  %vm755 = vcmp.eq.s32.totalorder %v735, %v63
  %vm756 = vcmp.eq.s32.totalorder %v738, %v63
  %vm757 = vcmp.eq.s32.totalorder %v741, %v63
  %vm758 = vcmp.eq.s32.totalorder %v744, %v63
  %vm759 = vcmp.eq.s32.totalorder %v747, %v63
  %vm760 = vcmp.eq.s32.totalorder %v750, %v63
  %vm761 = vcmp.eq.s32.totalorder %v753, %v63
  %vm762 = vmor %vm714, %vm754
  %vm763 = vmor %vm715, %vm755
  %vm764 = vmor %vm716, %vm756
  %vm765 = vmor %vm717, %vm757
  %vm766 = vmor %vm718, %vm758
  %vm767 = vmor %vm719, %vm759
  %vm768 = vmor %vm720, %vm760
  %vm769 = vmor %vm721, %vm761
  %v770 = vsel %vm762, %v262, 0.0
  %v771 = vsel %vm763, %v269, 0.0
  %v772 = vsel %vm764, %v276, 0.0
  %v773 = vsel %vm765, %v283, 0.0
  %v774 = vsel %vm766, %v290, 0.0
  %v775 = vsel %vm767, %v297, 0.0
  %v776 = vsel %vm768, %v304, 0.0
  %v777 = vsel %vm769, %v311, 0.0
  %v778 = vrot.slane %v770, 4
  %v779 = vadd.f32 %v770, %v778
  %v780 = vrot.slane %v779, 2
  %v781 = vadd.f32 %v779, %v780
  %v782 = vrot.slane %v781, 1
  %v783 = vadd.f32 %v781, %v782
  %v784 = vrot.slane %v771, 4
  %v785 = vadd.f32 %v771, %v784
  %v786 = vrot.slane %v785, 2
  %v787 = vadd.f32 %v785, %v786
  %v788 = vrot.slane %v787, 1
  %v789 = vadd.f32 %v787, %v788
  %v790 = vrot.slane %v772, 4
  %v791 = vadd.f32 %v772, %v790
  %v792 = vrot.slane %v791, 2
  %v793 = vadd.f32 %v791, %v792
  %v794 = vrot.slane %v793, 1
  %v795 = vadd.f32 %v793, %v794
  %v796 = vrot.slane %v773, 4
  %v797 = vadd.f32 %v773, %v796
  %v798 = vrot.slane %v797, 2
  %v799 = vadd.f32 %v797, %v798
  %v800 = vrot.slane %v799, 1
  %v801 = vadd.f32 %v799, %v800
  %v802 = vrot.slane %v774, 4
  %v803 = vadd.f32 %v774, %v802
  %v804 = vrot.slane %v803, 2
  %v805 = vadd.f32 %v803, %v804
  %v806 = vrot.slane %v805, 1
  %v807 = vadd.f32 %v805, %v806
  %v808 = vrot.slane %v775, 4
  %v809 = vadd.f32 %v775, %v808
  %v810 = vrot.slane %v809, 2
  %v811 = vadd.f32 %v809, %v810
  %v812 = vrot.slane %v811, 1
  %v813 = vadd.f32 %v811, %v812
  %v814 = vrot.slane %v776, 4
  %v815 = vadd.f32 %v776, %v814
  %v816 = vrot.slane %v815, 2
  %v817 = vadd.f32 %v815, %v816
  %v818 = vrot.slane %v817, 1
  %v819 = vadd.f32 %v817, %v818
  %v820 = vrot.slane %v777, 4
  %v821 = vadd.f32 %v777, %v820
  %v822 = vrot.slane %v821, 2
  %v823 = vadd.f32 %v821, %v822
  %v824 = vrot.slane %v823, 1
  %v825 = vadd.f32 %v823, %v824
  %v826 = vld [vmem:[%s10] sm:$0xff]
  %v827 = vld [vmem:[%s10 + $0x8] sm:$0xff]
  %v828 = vld [vmem:[%s10 + $0x10] sm:$0xff]
  %v829 = vld [vmem:[%s10 + $0x18] sm:$0xff]
  %v830 = vld [vmem:[%s10 + $0x20] sm:$0xff]
  %v831 = vld [vmem:[%s10 + $0x28] sm:$0xff]
  %v832 = vld [vmem:[%s10 + $0x30] sm:$0xff]
  %v833 = vld [vmem:[%s10 + $0x38] sm:$0xff]
  %v834 = vld [vmem:[%s10 + $0x40] sm:$0xff]
  %v835 = vld [vmem:[%s10 + $0x48] sm:$0xff]
  %v836 = vld [vmem:[%s10 + $0x50] sm:$0xff]
  %v837 = vld [vmem:[%s10 + $0x58] sm:$0xff]
  %v838 = vld [vmem:[%s10 + $0x60] sm:$0xff]
  %v839 = vld [vmem:[%s10 + $0x68] sm:$0xff]
  %v840 = vld [vmem:[%s10 + $0x70] sm:$0xff]
  %v841 = vld [vmem:[%s10 + $0x78] sm:$0xff]
  %v850 = vsel %vm398, %v789, %v783
  %v851 = vsel %vm400, %v795, %v850
  %v852 = vsel %vm402, %v801, %v851
  %v853 = vsel %vm404, %v807, %v852
  %v854 = vsel %vm406, %v813, %v853
  %v855 = vsel %vm408, %v819, %v854
  %v856 = vsel %vm410, %v825, %v855
  %858 = vmatpush.msra.mxu0 %v841
  %859 = vmatpush.msra.mxu0 %v840
  %860 = vmatpush.msra.mxu0 %v839
  %861 = vmatpush.msra.mxu0 %v838
  %862 = vmatpush.msra.mxu0 %v837
  %863 = vmatpush.msra.mxu0 %v836
  %864 = vmatpush.msra.mxu0 %v835
  %865 = vmatpush.msra.mxu0 %v834
  %866 = vmatpush.msra.mxu0 %v833
  %867 = vmatpush.msra.mxu0 %v832
  %868 = vmatpush.msra.mxu0 %v831
  %869 = vmatpush.msra.mxu0 %v830
  %870 = vmatpush.msra.mxu0 %v829
  %871 = vmatpush.msra.mxu0 %v828
  %872 = vmatpush.msra.mxu0 %v827
  %873 = vmatpush.msra.mxu0 %v826
  %874 = vmatmul.f32.gmra.mxu0 %v856
  %v875 = vpop.f32.mrf.mxu0
  %v876 = vadd.f32 0.0, %v875
  %877 = vdwg.mxu0
  %v878 = vld [vmem:[%s11] sm:$0xff]
  %v879 = vld [vmem:[%s11 + $0x8] sm:$0xff]
  %v880 = vld [vmem:[%s11 + $0x10] sm:$0xff]
  %v881 = vld [vmem:[%s11 + $0x18] sm:$0xff]
  %v882 = vld [vmem:[%s11 + $0x20] sm:$0xff]
  %v883 = vld [vmem:[%s11 + $0x28] sm:$0xff]
  %v884 = vld [vmem:[%s11 + $0x30] sm:$0xff]
  %v885 = vld [vmem:[%s11 + $0x38] sm:$0xff]
  %v886 = vld [vmem:[%s11 + $0x40] sm:$0xff]
  %v887 = vld [vmem:[%s11 + $0x48] sm:$0xff]
  %v888 = vld [vmem:[%s11 + $0x50] sm:$0xff]
  %v889 = vld [vmem:[%s11 + $0x58] sm:$0xff]
  %v890 = vld [vmem:[%s11 + $0x60] sm:$0xff]
  %v891 = vld [vmem:[%s11 + $0x68] sm:$0xff]
  %v892 = vld [vmem:[%s11 + $0x70] sm:$0xff]
  %v893 = vld [vmem:[%s11 + $0x78] sm:$0xff]
  %v895 = vsel %vm320, %v432, 0
  %897 = vmatpush.msra.mxu0 0.0
  %898 = vmatpush.msra.mxu0 0.0
  %899 = vmatpush.msra.mxu0 0.0
  %900 = vmatpush.msra.mxu0 0.0
  %901 = vmatpush.msra.mxu0 0.0
  %902 = vmatpush.msra.mxu0 0.0
  %903 = vmatpush.msra.mxu0 0.0
  %904 = vmatpush.msra.mxu0 0.0
  %905 = vmatpush.msra.mxu0 %v893
  %906 = vmatpush.msra.mxu0 %v892
  %907 = vmatpush.msra.mxu0 %v891
  %908 = vmatpush.msra.mxu0 %v890
  %909 = vmatpush.msra.mxu0 %v889
  %910 = vmatpush.msra.mxu0 %v888
  %911 = vmatpush.msra.mxu0 %v887
  %912 = vmatpush.msra.mxu0 %v886
  %913 = vmatmul.f32.gmra.mxu0 %v895
  %v914 = vpop.f32.mrf.mxu0
  %v915 = vadd.f32 0.0, %v914
  %916 = vdwg.mxu0
  %v918 = vsel %vm320, %v876, 0
  %920 = vmatpush.msra.mxu0 0.0
  %921 = vmatpush.msra.mxu0 0.0
  %922 = vmatpush.msra.mxu0 0.0
  %923 = vmatpush.msra.mxu0 0.0
  %924 = vmatpush.msra.mxu0 0.0
  %925 = vmatpush.msra.mxu0 0.0
  %926 = vmatpush.msra.mxu0 0.0
  %927 = vmatpush.msra.mxu0 0.0
  %928 = vmatpush.msra.mxu0 %v885
  %929 = vmatpush.msra.mxu0 %v884
  %930 = vmatpush.msra.mxu0 %v883
  %931 = vmatpush.msra.mxu0 %v882
  %932 = vmatpush.msra.mxu0 %v881
  %933 = vmatpush.msra.mxu0 %v880
  %934 = vmatpush.msra.mxu0 %v879
  %935 = vmatpush.msra.mxu0 %v878
  %936 = vmatmul.f32.gmra.mxu0 %v918
  %v937 = vpop.f32.mrf.mxu0
  %v938 = vadd.f32 %v915, %v937
  %939 = vdwg.mxu0
  %v940 = vld [vmem:[%s12] sm:$0x1]
  %v942 = vperm.slane %v940, 0
  %v944 = vadd.f32 %v938, %v942
  %945 = vst [vmem:[%s13] sm:$0xff] %v944
  // Predicated region
  $region54: #{linear_regression_forward.1} parent=0 // pred_check
    _
  $region55: #{linear_regression_forward.1} parent=0 // pred_check_branch
    %947 = sbr.rel (0) target = $region57
  $region56: #{linear_regression_forward.1} parent=0 // pred_region
    _
  $region57: #{linear_regression_forward.1} parent=0 // pred_fallthru
    _
  // Predicated region
  $region58: #{linear_regression_forward.1} parent=0 // pred_check
    _
  $region59: #{linear_regression_forward.1} parent=0 // pred_check_branch
    %949 = sbr.rel (0) target = $region61
  $region60: #{linear_regression_forward.1} parent=0 // pred_region
    _
  $region61: #{linear_regression_forward.1} parent=0 // pred_fallthru
    _

</llo_original>
